<compile_context>
chip_gen: v7x
topology: tpu7x:2x2x1
jax: 0.10.0
libtpu: 0.0.40
codegen_flags: <defaults>
</compile_context>

<pallas_src>
import functools

import jax
import jax.numpy as jnp
from jax.experimental import pallas as pl
from jax.experimental.pallas import tpu as pltpu


def _gaussian_smearing_kernel(coeff_ref, dist_ref, offset_ref, out_ref):
    # coeff_ref:  (1, 1)        SMEM scalar (trainable parameter)
    # dist_ref:   (TM, 1)       VMEM (edge tile, column)
    # offset_ref: (1, num_rbf)  VMEM (RBF centers along lanes)
    # out_ref:    (TM, num_rbf) VMEM
    d = dist_ref[...]                       # (TM, 1)
    off = offset_ref[...]                   # (1, R)
    diff = d - off                          # broadcast -> (TM, R)
    coeff = coeff_ref[0, 0]
    out_ref[...] = jnp.exp(coeff * diff * diff).astype(out_ref.dtype)


def _round_up(x, m):
    return ((x + m - 1) // m) * m


@functools.partial(jax.jit, static_argnames=("tile_m", "out_dtype"))
def gaussian_smearing(dist, offset, coeff, *, tile_m=4096, out_dtype=jnp.float32):
    """dist: (E,) float; offset: (num_rbf,) float; coeff: scalar float.

    Returns (E, num_rbf) `out_dtype`, matching the PyTorch module's forward
    (default float32).  `tile_m` is the edge-tile size (sweep 2048-8192 for
    very large E; it is clamped for small inputs).
    """
    E = dist.shape[0]
    num_rbf = offset.shape[0]

    # Clamp the tile for small inputs; keep it a multiple of 8 (sublane rule).
    # No explicit padding of E: Pallas handles the partial boundary block.
    tile = min(int(tile_m), _round_up(max(E, 8), 8))
    grid = (pl.cdiv(E, tile),)

    dist2d = dist.astype(jnp.float32).reshape(E, 1)
    offset2d = offset.astype(jnp.float32).reshape(1, num_rbf)
    coeff2d = jnp.asarray(coeff, jnp.float32).reshape(1, 1)

    out_itemsize = jnp.dtype(out_dtype).itemsize
    cost = pl.CostEstimate(
        flops=3 * E * num_rbf,                 # sub, mul, mul per element
        transcendentals=E * num_rbf,           # one exp per element
        bytes_accessed=4 * E + 4 * num_rbf + out_itemsize * E * num_rbf,
    )

    return pl.pallas_call(
        _gaussian_smearing_kernel,
        out_shape=jax.ShapeDtypeStruct((E, num_rbf), out_dtype),
        grid_spec=pltpu.PrefetchScalarGridSpec(
            num_scalar_prefetch=0,
            grid=grid,
            in_specs=[
                # coeff scalar lives in SMEM, same (1,1) block every step.
                pl.BlockSpec((1, 1), lambda i: (0, 0),
                             memory_space=pltpu.SMEM),
                # per-tile slab of distances along the edge axis.
                pl.BlockSpec((tile, 1), lambda i: (i, 0)),
                # full offset vector; constant block index -> fetched once.
                pl.BlockSpec((1, num_rbf), lambda i: (0, 0)),
            ],
            out_specs=pl.BlockSpec((tile, num_rbf), lambda i: (i, 0)),
        ),
        compiler_params=pltpu.CompilerParams(
            # Edge tiles are independent -> shard across TensorCores (v7x).
            dimension_semantics=("parallel",),
            # Explicit scoped-VMEM budget: double-buffered lane-padded
            # (tile,1)/(tile,num_rbf) buffers at tile<=8192 fit comfortably,
            # and 32 MiB is safe on v5e/v6e (128 MiB) and v7x (64 MiB).
            vmem_limit_bytes=32 * 1024 * 1024,
        ),
        cost_estimate=cost,
    )(coeff2d, dist2d, offset2d)


def make_gaussian_smearing_params(cutoff_lower=0.0, cutoff_upper=5.0, num_rbf=50):
    """Deterministic parameter init, mirroring GaussianSmearing._initial_params.

    num_rbf must be >= 2 (offset[1] is indexed), as in the PyTorch module.
    """
    offset = jnp.linspace(cutoff_lower, cutoff_upper, num_rbf, dtype=jnp.float32)
    coeff = -0.5 / (offset[1] - offset[0]) ** 2
    return offset, coeff


def gaussian_smearing_ref(dist, offset, coeff):
    """Pure-JAX reference of the PyTorch forward."""
    d = dist[:, None] - offset[None, :]
    return jnp.exp(coeff * d * d)


if __name__ == "__main__":
    key = jax.random.PRNGKey(0)
    cutoff_lower, cutoff_upper, num_rbf = 0.0, 5.0, 50
    offset, coeff = make_gaussian_smearing_params(
        cutoff_lower, cutoff_upper, num_rbf)

    # Small deterministic example: 256 edge distances, 50 RBFs (module default).
    k0, k1 = jax.random.split(key)
    dist_small = jax.random.uniform(
        k0, (256,), dtype=jnp.float32, minval=cutoff_lower, maxval=cutoff_upper)
    out_small = jax.block_until_ready(gaussian_smearing(dist_small, offset, coeff))
    ref_small = gaussian_smearing_ref(dist_small, offset, coeff)
    assert out_small.shape == (256, num_rbf), out_small.shape
    assert jnp.allclose(out_small, ref_small, atol=1e-6, rtol=1e-5), \
        "mismatch vs reference (small)"

    # Second check: edge count not a multiple of the tile -> exercises the
    # partial boundary block and the multi-step grid.
    dist_odd = jax.random.uniform(
        k1, (5000,), dtype=jnp.float32, minval=cutoff_lower, maxval=cutoff_upper)
    out_odd = jax.block_until_ready(gaussian_smearing(dist_odd, offset, coeff))
    ref_odd = gaussian_smearing_ref(dist_odd, offset, coeff)
    assert out_odd.shape == (5000, num_rbf), out_odd.shape
    assert jnp.allclose(out_odd, ref_odd, atol=1e-6, rtol=1e-5), \
        "mismatch vs reference (partial boundary block)"

    print("KERNEL_OK")
</pallas_src>

<mosaic_0001>
module attributes {stable_mosaic.version = 11 : i64} {
  func.func @_gaussian_smearing_kernel(%arg0: i32, %arg1: memref<1x1xf32, #tpu.memory_space<smem>>, %arg2: memref<256x1xf32, #tpu.memory_space<vmem>>, %arg3: memref<1x50xf32, #tpu.memory_space<vmem>>, %arg4: memref<256x50xf32, #tpu.memory_space<vmem>>) attributes {dimension_semantics = [#tpu.dimension_semantics<parallel>], iteration_bounds = array<i64: 1>, scalar_prefetch = 0 : i64, scratch_operands = 0 : i64, tpu.core_type = #tpu.core_type<tc>, window_params = [{transform_indices = @transform_0, window_bounds = array<i64: 1, 1>}, {transform_indices = @transform_1, window_bounds = array<i64: 256, 1>}, {pipeline_mode = #tpu.pipeline_mode<synchronous>, transform_indices = @transform_2, window_bounds = array<i64: 1, 50>}, {transform_indices = @transform_3, window_bounds = array<i64: 256, 50>}]} {
    %c0 = arith.constant 0 : index
    %c0_0 = arith.constant 0 : index
    %0 = vector.load %arg2[%c0, %c0_0] : memref<256x1xf32, #tpu.memory_space<vmem>>, vector<256x1xf32>
    %c0_1 = arith.constant 0 : index
    %c0_2 = arith.constant 0 : index
    %1 = vector.load %arg3[%c0_1, %c0_2] : memref<1x50xf32, #tpu.memory_space<vmem>>, vector<1x50xf32>
    %2 = vector.broadcast %0 : vector<256x1xf32> to vector<256x50xf32>
    %3 = vector.broadcast %1 : vector<1x50xf32> to vector<256x50xf32>
    %4 = arith.subf %2, %3 : vector<256x50xf32>
    %c0_3 = arith.constant 0 : index
    %c0_4 = arith.constant 0 : index
    %5 = memref.load %arg1[%c0_3, %c0_4] : memref<1x1xf32, #tpu.memory_space<smem>>
    %6 = vector.broadcast %5 : f32 to vector<256x50xf32>
    %7 = arith.mulf %6, %4 : vector<256x50xf32>
    %8 = arith.mulf %7, %4 : vector<256x50xf32>
    %9 = math.exp %8 : vector<256x50xf32>
    %c0_5 = arith.constant 0 : index
    %c0_6 = arith.constant 0 : index
    %10 = vector.load %arg4[%c0_5, %c0_6] : memref<256x50xf32, #tpu.memory_space<vmem>>, vector<256x50xf32>
    tpu.vector_store %arg4[%c0_5, %c0_6], %9 {strides = array<i32>} : memref<256x50xf32, #tpu.memory_space<vmem>>, vector<256x50xf32>,
    return
  }
  func.func @transform_0(%arg0: i32) -> (i32, i32) {
    %c0_i32 = arith.constant 0 : i32
    %c0_i32_0 = arith.constant 0 : i32
    %c0_i32_1 = arith.constant 0 : i32
    return %c0_i32, %c0_i32_0 : i32, i32
  }
  func.func @transform_1(%arg0: i32) -> (i32, i32) {
    %c0_i32 = arith.constant 0 : i32
    %c0_i32_0 = arith.constant 0 : i32
    return %arg0, %c0_i32 : i32, i32
  }
  func.func @transform_2(%arg0: i32) -> (i32, i32) {
    %c0_i32 = arith.constant 0 : i32
    %c0_i32_0 = arith.constant 0 : i32
    %c0_i32_1 = arith.constant 0 : i32
    return %c0_i32, %c0_i32_0 : i32, i32
  }
  func.func @transform_3(%arg0: i32) -> (i32, i32) {
    %c0_i32 = arith.constant 0 : i32
    %c0_i32_0 = arith.constant 0 : i32
    return %arg0, %c0_i32 : i32, i32
  }
}

</mosaic_0001>

<llo_original>
// kernel: gaussian_smearing.1
$region0: #{gaussian_smearing.1}
  #allocation0 [shape = 'u32[]', space=smem, size = 0x4, offset = 0x4, fixed_abs, tag = 'smem constant byte address 0x4 - core index']
  #allocation1 [shape = 'u32[144,128]{1,0:T(1,128)}', space=vmem, size = 0x12000, scoped, tag = 'internal scratch']
  #allocation2 [shape = 'f32[1,1]{1,0:T(1,128)S(6)}', space=smem, size = 0x200, scoped, tag = 'scoped memory for gaussian_smearing.1']
  %s0 = inlined_call_operand.<no memory space> [shape: f32[1,1], index: 0, kind: input, shape index: {}]
  %s1 = inlined_call_operand.vmem [shape: f32[256,1], index: 1, kind: input, shape index: {}]
  %s2 = inlined_call_operand.vmem [shape: f32[1,50], index: 2, kind: input, shape index: {}]
  %s3 = inlined_call_operand.vmem [shape: f32[256,50], index: 3, kind: output, shape index: {}]
  %s4 = sld [smem:[#allocation0]]
  $region22: #{gaussian_smearing.1} parent=0
    _
  %s6 = ssub.s32 1, %s4
  %s7 = scalar_select 0, %s6, %s4
  %8 = sst [smem:[#allocation2]] %s0
  // Predicated region
  $region2: #{gaussian_smearing.1} parent=0 // pred_check
    _
  $region3: #{gaussian_smearing.1} parent=0 // pred_check_branch
    %10 = sbr.rel (0) target = $region5
  $region4: #{gaussian_smearing.1} parent=0 // pred_region
    _
  $region5: #{gaussian_smearing.1} parent=0 // pred_fallthru
    _
  // Predicated region
  $region6: #{gaussian_smearing.1} parent=0 // pred_check
    _
  $region7: #{gaussian_smearing.1} parent=0 // pred_check_branch
    %12 = sbr.rel (0) target = $region9
  $region8: #{gaussian_smearing.1} parent=0 // pred_region
    _
  $region9: #{gaussian_smearing.1} parent=0 // pred_fallthru
    _
  // Predicated region
  $region10: #{gaussian_smearing.1} parent=0 // pred_check
    _
  $region11: #{gaussian_smearing.1} parent=0 // pred_check_branch
    %14 = sbr.rel (0) target = $region13
  $region12: #{gaussian_smearing.1} parent=0 // pred_region
    _
  $region13: #{gaussian_smearing.1} parent=0 // pred_fallthru
    _
  %v15 = vld [vmem:[%s1] sm:$0xff]
  %v16 = vld [vmem:[%s1 + $0x8] sm:$0xff]
  %v17 = vld [vmem:[%s1 + $0x10] sm:$0xff]
  %v18 = vld [vmem:[%s1 + $0x18] sm:$0xff]
  %v19 = vld [vmem:[%s1 + $0x20] sm:$0xff]
  %v20 = vld [vmem:[%s1 + $0x28] sm:$0xff]
  %v21 = vld [vmem:[%s1 + $0x30] sm:$0xff]
  %v22 = vld [vmem:[%s1 + $0x38] sm:$0xff]
  %v23 = vld [vmem:[%s1 + $0x40] sm:$0xff]
  %v24 = vld [vmem:[%s1 + $0x48] sm:$0xff]
  %v25 = vld [vmem:[%s1 + $0x50] sm:$0xff]
  %v26 = vld [vmem:[%s1 + $0x58] sm:$0xff]
  %v27 = vld [vmem:[%s1 + $0x60] sm:$0xff]
  %v28 = vld [vmem:[%s1 + $0x68] sm:$0xff]
  %v29 = vld [vmem:[%s1 + $0x70] sm:$0xff]
  %v30 = vld [vmem:[%s1 + $0x78] sm:$0xff]
  %v31 = vld [vmem:[%s1 + $0x80] sm:$0xff]
  %v32 = vld [vmem:[%s1 + $0x88] sm:$0xff]
  %v33 = vld [vmem:[%s1 + $0x90] sm:$0xff]
  %v34 = vld [vmem:[%s1 + $0x98] sm:$0xff]
  %v35 = vld [vmem:[%s1 + $0xa0] sm:$0xff]
  %v36 = vld [vmem:[%s1 + $0xa8] sm:$0xff]
  %v37 = vld [vmem:[%s1 + $0xb0] sm:$0xff]
  %v38 = vld [vmem:[%s1 + $0xb8] sm:$0xff]
  %v39 = vld [vmem:[%s1 + $0xc0] sm:$0xff]
  %v40 = vld [vmem:[%s1 + $0xc8] sm:$0xff]
  %v41 = vld [vmem:[%s1 + $0xd0] sm:$0xff]
  %v42 = vld [vmem:[%s1 + $0xd8] sm:$0xff]
  %v43 = vld [vmem:[%s1 + $0xe0] sm:$0xff]
  %v44 = vld [vmem:[%s1 + $0xe8] sm:$0xff]
  %v45 = vld [vmem:[%s1 + $0xf0] sm:$0xff]
  %v46 = vld [vmem:[%s1 + $0xf8] sm:$0xff]
  %v47 = vld [vmem:[%s2] sm:$0x1]
  %49 = vset.pattern.permute.xlu0 0
  %50 = vperm.xlu0 %49, %v15
  %v51 = vpop.permute.xlu0 %50
  %54 = vset.pattern.permute.xlu0 0
  %55 = vperm.xlu0 %54, %v16
  %v56 = vpop.permute.xlu0 %55
  %59 = vset.pattern.permute.xlu0 0
  %60 = vperm.xlu0 %59, %v17
  %v61 = vpop.permute.xlu0 %60
  %64 = vset.pattern.permute.xlu0 0
  %65 = vperm.xlu0 %64, %v18
  %v66 = vpop.permute.xlu0 %65
  %69 = vset.pattern.permute.xlu0 0
  %70 = vperm.xlu0 %69, %v19
  %v71 = vpop.permute.xlu0 %70
  %74 = vset.pattern.permute.xlu0 0
  %75 = vperm.xlu0 %74, %v20
  %v76 = vpop.permute.xlu0 %75
  %79 = vset.pattern.permute.xlu0 0
  %80 = vperm.xlu0 %79, %v21
  %v81 = vpop.permute.xlu0 %80
  %84 = vset.pattern.permute.xlu0 0
  %85 = vperm.xlu0 %84, %v22
  %v86 = vpop.permute.xlu0 %85
  %89 = vset.pattern.permute.xlu0 0
  %90 = vperm.xlu0 %89, %v23
  %v91 = vpop.permute.xlu0 %90
  %94 = vset.pattern.permute.xlu0 0
  %95 = vperm.xlu0 %94, %v24
  %v96 = vpop.permute.xlu0 %95
  %99 = vset.pattern.permute.xlu0 0
  %100 = vperm.xlu0 %99, %v25
  %v101 = vpop.permute.xlu0 %100
  %104 = vset.pattern.permute.xlu0 0
  %105 = vperm.xlu0 %104, %v26
  %v106 = vpop.permute.xlu0 %105
  %109 = vset.pattern.permute.xlu0 0
  %110 = vperm.xlu0 %109, %v27
  %v111 = vpop.permute.xlu0 %110
  %114 = vset.pattern.permute.xlu0 0
  %115 = vperm.xlu0 %114, %v28
  %v116 = vpop.permute.xlu0 %115
  %119 = vset.pattern.permute.xlu0 0
  %120 = vperm.xlu0 %119, %v29
  %v121 = vpop.permute.xlu0 %120
  %124 = vset.pattern.permute.xlu0 0
  %125 = vperm.xlu0 %124, %v30
  %v126 = vpop.permute.xlu0 %125
  %129 = vset.pattern.permute.xlu0 0
  %130 = vperm.xlu0 %129, %v31
  %v131 = vpop.permute.xlu0 %130
  %134 = vset.pattern.permute.xlu0 0
  %135 = vperm.xlu0 %134, %v32
  %v136 = vpop.permute.xlu0 %135
  %139 = vset.pattern.permute.xlu0 0
  %140 = vperm.xlu0 %139, %v33
  %v141 = vpop.permute.xlu0 %140
  %144 = vset.pattern.permute.xlu0 0
  %145 = vperm.xlu0 %144, %v34
  %v146 = vpop.permute.xlu0 %145
  %149 = vset.pattern.permute.xlu0 0
  %150 = vperm.xlu0 %149, %v35
  %v151 = vpop.permute.xlu0 %150
  %154 = vset.pattern.permute.xlu0 0
  %155 = vperm.xlu0 %154, %v36
  %v156 = vpop.permute.xlu0 %155
  %159 = vset.pattern.permute.xlu0 0
  %160 = vperm.xlu0 %159, %v37
  %v161 = vpop.permute.xlu0 %160
  %164 = vset.pattern.permute.xlu0 0
  %165 = vperm.xlu0 %164, %v38
  %v166 = vpop.permute.xlu0 %165
  %169 = vset.pattern.permute.xlu0 0
  %170 = vperm.xlu0 %169, %v39
  %v171 = vpop.permute.xlu0 %170
  %174 = vset.pattern.permute.xlu0 0
  %175 = vperm.xlu0 %174, %v40
  %v176 = vpop.permute.xlu0 %175
  %179 = vset.pattern.permute.xlu0 0
  %180 = vperm.xlu0 %179, %v41
  %v181 = vpop.permute.xlu0 %180
  %184 = vset.pattern.permute.xlu0 0
  %185 = vperm.xlu0 %184, %v42
  %v186 = vpop.permute.xlu0 %185
  %189 = vset.pattern.permute.xlu0 0
  %190 = vperm.xlu0 %189, %v43
  %v191 = vpop.permute.xlu0 %190
  %194 = vset.pattern.permute.xlu0 0
  %195 = vperm.xlu0 %194, %v44
  %v196 = vpop.permute.xlu0 %195
  %199 = vset.pattern.permute.xlu0 0
  %200 = vperm.xlu0 %199, %v45
  %v201 = vpop.permute.xlu0 %200
  %204 = vset.pattern.permute.xlu0 0
  %205 = vperm.xlu0 %204, %v46
  %v206 = vpop.permute.xlu0 %205
  %v209 = vlaneseq
  %v210 = vshrl.u32 %v209, 7
  %v211 = vsub.s32 0, %v210
  %v212 = vrot.slane %v47, %v211
  %v214 = vsub.f32 %v51, %v212
  %v215 = vsub.f32 %v56, %v212
  %v216 = vsub.f32 %v61, %v212
  %v217 = vsub.f32 %v66, %v212
  %v218 = vsub.f32 %v71, %v212
  %v219 = vsub.f32 %v76, %v212
  %v220 = vsub.f32 %v81, %v212
  %v221 = vsub.f32 %v86, %v212
  %v222 = vsub.f32 %v91, %v212
  %v223 = vsub.f32 %v96, %v212
  %v224 = vsub.f32 %v101, %v212
  %v225 = vsub.f32 %v106, %v212
  %v226 = vsub.f32 %v111, %v212
  %v227 = vsub.f32 %v116, %v212
  %v228 = vsub.f32 %v121, %v212
  %v229 = vsub.f32 %v126, %v212
  %v230 = vsub.f32 %v131, %v212
  %v231 = vsub.f32 %v136, %v212
  %v232 = vsub.f32 %v141, %v212
  %v233 = vsub.f32 %v146, %v212
  %v234 = vsub.f32 %v151, %v212
  %v235 = vsub.f32 %v156, %v212
  %v236 = vsub.f32 %v161, %v212
  %v237 = vsub.f32 %v166, %v212
  %v238 = vsub.f32 %v171, %v212
  %v239 = vsub.f32 %v176, %v212
  %v240 = vsub.f32 %v181, %v212
  %v241 = vsub.f32 %v186, %v212
  %v242 = vsub.f32 %v191, %v212
  %v243 = vsub.f32 %v196, %v212
  %v244 = vsub.f32 %v201, %v212
  %v245 = vsub.f32 %v206, %v212
  %s246 = sld [smem:[#allocation2]]
  %v247 = vstv %s246
  %v248 = vmul.f32 %v247, %v214
  %v249 = vmul.f32 %v247, %v215
  %v250 = vmul.f32 %v247, %v216
  %v251 = vmul.f32 %v247, %v217
  %v252 = vmul.f32 %v247, %v218
  %v253 = vmul.f32 %v247, %v219
  %v254 = vmul.f32 %v247, %v220
  %v255 = vmul.f32 %v247, %v221
  %v256 = vmul.f32 %v247, %v222
  %v257 = vmul.f32 %v247, %v223
  %v258 = vmul.f32 %v247, %v224
  %v259 = vmul.f32 %v247, %v225
  %v260 = vmul.f32 %v247, %v226
  %v261 = vmul.f32 %v247, %v227
  %v262 = vmul.f32 %v247, %v228
  %v263 = vmul.f32 %v247, %v229
  %v264 = vmul.f32 %v247, %v230
  %v265 = vmul.f32 %v247, %v231
  %v266 = vmul.f32 %v247, %v232
  %v267 = vmul.f32 %v247, %v233
  %v268 = vmul.f32 %v247, %v234
  %v269 = vmul.f32 %v247, %v235
  %v270 = vmul.f32 %v247, %v236
  %v271 = vmul.f32 %v247, %v237
  %v272 = vmul.f32 %v247, %v238
  %v273 = vmul.f32 %v247, %v239
  %v274 = vmul.f32 %v247, %v240
  %v275 = vmul.f32 %v247, %v241
  %v276 = vmul.f32 %v247, %v242
  %v277 = vmul.f32 %v247, %v243
  %v278 = vmul.f32 %v247, %v244
  %v279 = vmul.f32 %v247, %v245
  %v280 = vmul.f32 %v248, %v214
  %v281 = vmul.f32 %v249, %v215
  %v282 = vmul.f32 %v250, %v216
  %v283 = vmul.f32 %v251, %v217
  %v284 = vmul.f32 %v252, %v218
  %v285 = vmul.f32 %v253, %v219
  %v286 = vmul.f32 %v254, %v220
  %v287 = vmul.f32 %v255, %v221
  %v288 = vmul.f32 %v256, %v222
  %v289 = vmul.f32 %v257, %v223
  %v290 = vmul.f32 %v258, %v224
  %v291 = vmul.f32 %v259, %v225
  %v292 = vmul.f32 %v260, %v226
  %v293 = vmul.f32 %v261, %v227
  %v294 = vmul.f32 %v262, %v228
  %v295 = vmul.f32 %v263, %v229
  %v296 = vmul.f32 %v264, %v230
  %v297 = vmul.f32 %v265, %v231
  %v298 = vmul.f32 %v266, %v232
  %v299 = vmul.f32 %v267, %v233
  %v300 = vmul.f32 %v268, %v234
  %v301 = vmul.f32 %v269, %v235
  %v302 = vmul.f32 %v270, %v236
  %v303 = vmul.f32 %v271, %v237
  %v304 = vmul.f32 %v272, %v238
  %v305 = vmul.f32 %v273, %v239
  %v306 = vmul.f32 %v274, %v240
  %v307 = vmul.f32 %v275, %v241
  %v308 = vmul.f32 %v276, %v242
  %v309 = vmul.f32 %v277, %v243
  %v310 = vmul.f32 %v278, %v244
  %v311 = vmul.f32 %v279, %v245
  %v312 = vmul.f32 %v280, 1.442695
  %v313 = vpow.pop %v312
  %v314 = vmul.f32 %v281, 1.442695
  %v315 = vpow.pop %v314
  %v316 = vmul.f32 %v282, 1.442695
  %v317 = vpow.pop %v316
  %v318 = vmul.f32 %v283, 1.442695
  %v319 = vpow.pop %v318
  %v320 = vmul.f32 %v284, 1.442695
  %v321 = vpow.pop %v320
  %v322 = vmul.f32 %v285, 1.442695
  %v323 = vpow.pop %v322
  %v324 = vmul.f32 %v286, 1.442695
  %v325 = vpow.pop %v324
  %v326 = vmul.f32 %v287, 1.442695
  %v327 = vpow.pop %v326
  %v328 = vmul.f32 %v288, 1.442695
  %v329 = vpow.pop %v328
  %v330 = vmul.f32 %v289, 1.442695
  %v331 = vpow.pop %v330
  %v332 = vmul.f32 %v290, 1.442695
  %v333 = vpow.pop %v332
  %v334 = vmul.f32 %v291, 1.442695
  %v335 = vpow.pop %v334
  %v336 = vmul.f32 %v292, 1.442695
  %v337 = vpow.pop %v336
  %v338 = vmul.f32 %v293, 1.442695
  %v339 = vpow.pop %v338
  %v340 = vmul.f32 %v294, 1.442695
  %v341 = vpow.pop %v340
  %v342 = vmul.f32 %v295, 1.442695
  %v343 = vpow.pop %v342
  %v344 = vmul.f32 %v296, 1.442695
  %v345 = vpow.pop %v344
  %v346 = vmul.f32 %v297, 1.442695
  %v347 = vpow.pop %v346
  %v348 = vmul.f32 %v298, 1.442695
  %v349 = vpow.pop %v348
  %v350 = vmul.f32 %v299, 1.442695
  %v351 = vpow.pop %v350
  %v352 = vmul.f32 %v300, 1.442695
  %v353 = vpow.pop %v352
  %v354 = vmul.f32 %v301, 1.442695
  %v355 = vpow.pop %v354
  %v356 = vmul.f32 %v302, 1.442695
  %v357 = vpow.pop %v356
  %v358 = vmul.f32 %v303, 1.442695
  %v359 = vpow.pop %v358
  %v360 = vmul.f32 %v304, 1.442695
  %v361 = vpow.pop %v360
  %v362 = vmul.f32 %v305, 1.442695
  %v363 = vpow.pop %v362
  %v364 = vmul.f32 %v306, 1.442695
  %v365 = vpow.pop %v364
  %v366 = vmul.f32 %v307, 1.442695
  %v367 = vpow.pop %v366
  %v368 = vmul.f32 %v308, 1.442695
  %v369 = vpow.pop %v368
  %v370 = vmul.f32 %v309, 1.442695
  %v371 = vpow.pop %v370
  %v372 = vmul.f32 %v310, 1.442695
  %v373 = vpow.pop %v372
  %v374 = vmul.f32 %v311, 1.442695
  %v375 = vpow.pop %v374
  %vm376 = vcmask 408576
  %377 = vst.msk [vmem:[%s3] sm:$0xff] %vm376, %v313
  %378 = vst.msk [vmem:[%s3 + $0x8] sm:$0xff] %vm376, %v315
  %379 = vst.msk [vmem:[%s3 + $0x10] sm:$0xff] %vm376, %v317
  %380 = vst.msk [vmem:[%s3 + $0x18] sm:$0xff] %vm376, %v319
  %381 = vst.msk [vmem:[%s3 + $0x20] sm:$0xff] %vm376, %v321
  %382 = vst.msk [vmem:[%s3 + $0x28] sm:$0xff] %vm376, %v323
  %383 = vst.msk [vmem:[%s3 + $0x30] sm:$0xff] %vm376, %v325
  %384 = vst.msk [vmem:[%s3 + $0x38] sm:$0xff] %vm376, %v327
  %385 = vst.msk [vmem:[%s3 + $0x40] sm:$0xff] %vm376, %v329
  %386 = vst.msk [vmem:[%s3 + $0x48] sm:$0xff] %vm376, %v331
  %387 = vst.msk [vmem:[%s3 + $0x50] sm:$0xff] %vm376, %v333
  %388 = vst.msk [vmem:[%s3 + $0x58] sm:$0xff] %vm376, %v335
  %389 = vst.msk [vmem:[%s3 + $0x60] sm:$0xff] %vm376, %v337
  %390 = vst.msk [vmem:[%s3 + $0x68] sm:$0xff] %vm376, %v339
  %391 = vst.msk [vmem:[%s3 + $0x70] sm:$0xff] %vm376, %v341
  %392 = vst.msk [vmem:[%s3 + $0x78] sm:$0xff] %vm376, %v343
  %393 = vst.msk [vmem:[%s3 + $0x80] sm:$0xff] %vm376, %v345
  %394 = vst.msk [vmem:[%s3 + $0x88] sm:$0xff] %vm376, %v347
  %395 = vst.msk [vmem:[%s3 + $0x90] sm:$0xff] %vm376, %v349
  %396 = vst.msk [vmem:[%s3 + $0x98] sm:$0xff] %vm376, %v351
  %397 = vst.msk [vmem:[%s3 + $0xa0] sm:$0xff] %vm376, %v353
  %398 = vst.msk [vmem:[%s3 + $0xa8] sm:$0xff] %vm376, %v355
  %399 = vst.msk [vmem:[%s3 + $0xb0] sm:$0xff] %vm376, %v357
  %400 = vst.msk [vmem:[%s3 + $0xb8] sm:$0xff] %vm376, %v359
  %401 = vst.msk [vmem:[%s3 + $0xc0] sm:$0xff] %vm376, %v361
  %402 = vst.msk [vmem:[%s3 + $0xc8] sm:$0xff] %vm376, %v363
  %403 = vst.msk [vmem:[%s3 + $0xd0] sm:$0xff] %vm376, %v365
  %404 = vst.msk [vmem:[%s3 + $0xd8] sm:$0xff] %vm376, %v367
  %405 = vst.msk [vmem:[%s3 + $0xe0] sm:$0xff] %vm376, %v369
  %406 = vst.msk [vmem:[%s3 + $0xe8] sm:$0xff] %vm376, %v371
  %407 = vst.msk [vmem:[%s3 + $0xf0] sm:$0xff] %vm376, %v373
  %408 = vst.msk [vmem:[%s3 + $0xf8] sm:$0xff] %vm376, %v375
  // Predicated region
  $region14: #{gaussian_smearing.1} parent=0 // pred_check
    _
  $region15: #{gaussian_smearing.1} parent=0 // pred_check_branch
    %410 = sbr.rel (0) target = $region17
  $region16: #{gaussian_smearing.1} parent=0 // pred_region
    _
  $region17: #{gaussian_smearing.1} parent=0 // pred_fallthru
    _
  // Predicated region
  $region18: #{gaussian_smearing.1} parent=0 // pred_check
    _
  $region19: #{gaussian_smearing.1} parent=0 // pred_check_branch
    %412 = sbr.rel (0) target = $region21
  $region20: #{gaussian_smearing.1} parent=0 // pred_region
    _
  $region21: #{gaussian_smearing.1} parent=0 // pred_fallthru
    _

</llo_original>
